<compile_context>
chip_gen: v6e
topology: v6e:2x2x1
jax: 0.10.0
libtpu: 0.0.40
codegen_flags: <defaults>
</compile_context>

<pallas_src>
import jax
import jax.numpy as jnp
from jax.experimental import pallas as pl
from jax.experimental.pallas import tpu as pltpu


def _model_kernel(x_ref, a_ref, b_ref):
    # x_ref: (B, C*L) float32 — x.view(B, -1)
    # a_ref: (B, C*L) float32 — tan branch: tanh(tanh(tan(x)))
    # b_ref: (B, C*L) float32 — tanh branch: tanh^5(x)  (un-permuted; permutation is in wrapper)
    xf = x_ref[...]

    # x branch: tan, then the two tanh's applied after the final cat.
    a_ref[...] = jnp.tanh(jnp.tanh(jnp.tan(xf)))

    # y branch: 3 tanh's from the view/tanh chain + 2 final tanh's = 5 total.
    b = xf
    for _ in range(5):
        b = jnp.tanh(b)
    b_ref[...] = b


@jax.jit
def model_forward(x):
    """x: (B, C, L) float32, B even. Returns (2*B*C*L,) float32."""
    B, C, L = x.shape
    assert B % 2 == 0, "torch.chunk(y, 2, dim=0) semantics require even B"
    CL = C * L
    xf = x.astype(jnp.float32).reshape(B, CL)          # free, fused under jit

    a, b = pl.pallas_call(
        _model_kernel,
        out_shape=(
            jax.ShapeDtypeStruct((B, CL), jnp.float32),
            jax.ShapeDtypeStruct((B, CL), jnp.float32),
        ),
        in_specs=[pl.BlockSpec(memory_space=pltpu.MemorySpace.VMEM)],
        out_specs=(
            pl.BlockSpec(memory_space=pltpu.MemorySpace.VMEM),
            pl.BlockSpec(memory_space=pltpu.MemorySpace.VMEM),
        ),
    )(xf)

    # chunk(2, dim=0) + cat(dim=1) + view(-1)  ==  interleave rows of the two halves:
    #   final row order = [0, half, 1, half+1, 2, half+2, ...]
    # Applied here (fused reshape/transpose), since tanh commutes with the permutation.
    half = B // 2
    y = b.reshape(2, half, CL).transpose(1, 0, 2).reshape(-1)

    # cat((tan branch, tanh branch), dim=0), flattened: (2*B*C*L,)
    return jnp.concatenate([a.reshape(-1), y], axis=0)


if __name__ == "__main__":
    key = jax.random.PRNGKey(0)
    x = jax.random.normal(key, (6, 3, 4), dtype=jnp.float32)

    result = model_forward(x)
    jax.block_until_ready(result)

    # Pure-JAX reference of the same (fixed) semantics.
    xf = x.reshape(6, -1)
    y = jnp.tanh(xf)
    x1, x2 = y[:3], y[3:]
    y = jnp.concatenate([x1, x2], axis=1).reshape(-1)
    y = jnp.tanh(y)
    y = jnp.tanh(y)
    xr = jnp.tan(x).reshape(-1)
    ref = jnp.concatenate([xr, y], axis=0)
    ref = jnp.tanh(jnp.tanh(ref))

    assert result.shape == (144,), result.shape
    assert jnp.allclose(result, ref, atol=1e-6, rtol=1e-6)
    print("KERNEL_OK")
</pallas_src>

<mosaic_0001>
module attributes {stable_mosaic.version = 11 : i64} {
  func.func @_model_kernel(%arg0: memref<6x12xf32, #tpu.memory_space<vmem>>, %arg1: memref<6x12xf32, #tpu.memory_space<vmem>>, %arg2: memref<6x12xf32, #tpu.memory_space<vmem>>) attributes {dimension_semantics = [], scalar_prefetch = 0 : i64, scratch_operands = 0 : i64, tpu.core_type = #tpu.core_type<tc>} {
    %c0 = arith.constant 0 : index
    %c0_0 = arith.constant 0 : index
    %0 = vector.load %arg0[%c0, %c0_0] : memref<6x12xf32, #tpu.memory_space<vmem>>, vector<6x12xf32>
    %1 = math.tan %0 : vector<6x12xf32>
    %2 = math.tanh %1 : vector<6x12xf32>
    %3 = math.tanh %2 : vector<6x12xf32>
    %c0_1 = arith.constant 0 : index
    %c0_2 = arith.constant 0 : index
    %4 = vector.load %arg1[%c0_1, %c0_2] : memref<6x12xf32, #tpu.memory_space<vmem>>, vector<6x12xf32>
    tpu.vector_store %arg1[%c0_1, %c0_2], %3 {strides = array<i32>} : memref<6x12xf32, #tpu.memory_space<vmem>>, vector<6x12xf32>,
    %5 = math.tanh %0 : vector<6x12xf32>
    %6 = math.tanh %5 : vector<6x12xf32>
    %7 = math.tanh %6 : vector<6x12xf32>
    %8 = math.tanh %7 : vector<6x12xf32>
    %9 = math.tanh %8 : vector<6x12xf32>
    %c0_3 = arith.constant 0 : index
    %c0_4 = arith.constant 0 : index
    %10 = vector.load %arg2[%c0_3, %c0_4] : memref<6x12xf32, #tpu.memory_space<vmem>>, vector<6x12xf32>
    tpu.vector_store %arg2[%c0_3, %c0_4], %9 {strides = array<i32>} : memref<6x12xf32, #tpu.memory_space<vmem>>, vector<6x12xf32>,
    return
  }
}

</mosaic_0001>

<llo_original>
// kernel: model_forward.1
$region0: #{model_forward.1}
  #allocation0 [shape = 'u32[]', space=smem, size = 0x4, offset = 0x4, fixed_abs, tag = 'smem constant byte address 0x4 - core index']
  #allocation1 [shape = 'u32[144,128]{1,0:T(1,128)}', space=vmem, size = 0x12000, scoped, tag = 'internal scratch']
  %s0 = inlined_call_operand.vmem [shape: f32[6,12], index: 0, kind: input, shape index: {}]
  %s1 = inlined_call_operand.vmem [shape: f32[6,12], index: 1, kind: output, shape index: {0}]
  %s2 = inlined_call_operand.vmem [shape: f32[6,12], index: 2, kind: output, shape index: {1}]
  %3 = xla_tuple %s1, %s2
  %s4 = sld [smem:[#allocation0]]
  $region22: #{model_forward.1} parent=0
    _
  %s6 = ssub.s32 1, %s4
  %s7 = scalar_select 0, %s6, %s4
  // Predicated region
  $region2: #{model_forward.1} parent=0 // pred_check
    _
  $region3: #{model_forward.1} parent=0 // pred_check_branch
    %9 = sbr.rel (0) target = $region5
  $region4: #{model_forward.1} parent=0 // pred_region
    _
  $region5: #{model_forward.1} parent=0 // pred_fallthru
    _
  %v10 = vld [vmem:[%s0] sm:$0x3f]
  %v11 = vand.u32 2147483647, %v10
  %vm12 = vcmp.le.f32.partialorder %v11, 0.7853982
  %vm13 = vcmp.lt.s32.totalorder %v10, 0
  %v14 = vand.u32 %v10, 2139095040
  %v15 = vshrl.u32 %v14, 23
  %v16 = vsub.s32 %v15, 127
  %v17 = vand.u32 2147483647, %v10
  %v18 = vand.u32 %v17, 8388607
  %v19 = vor.u32 %v18, 8388608
  %v20 = vsub.s32 0, %v19
  %v21 = vadd.s32 %v16, 1
  %vm22 = vcmp.gt.s32.totalorder %v21, 0
  %v23 = vsel %vm22, %v21, 0
  %v24 = vshrl.u32 %v23, 5
  %v25 = vand.u32 %v23, 31
  %v26 = vsub.s32 32, %v25
  %v27 = vshrl.u32 683565275, %v26
  %v28 = vshll.u32 683565275, %v25
  %v29 = vshrl.u32 2475754826, %v26
  %v30 = vor.u32 %v28, %v29
  %v31 = vshll.u32 2475754826, %v25
  %v32 = vshrl.u32 2131351028, %v26
  %v33 = vor.u32 %v31, %v32
  %v34 = vshll.u32 2131351028, %v25
  %v35 = vshrl.u32 2102212464, %v26
  %v36 = vor.u32 %v34, %v35
  %v37 = vshll.u32 2102212464, %v25
  %v38 = vshrl.u32 920167782, %v26
  %v39 = vor.u32 %v37, %v38
  %v40 = vshll.u32 920167782, %v25
  %v41 = vshrl.u32 1326507024, %v26
  %v42 = vor.u32 %v40, %v41
  %vm43 = vcmp.lt.s32.totalorder %v24, 1
  %vm44 = vcmp.lt.s32.totalorder %v24, 2
  %vm45 = vcmp.lt.s32.totalorder %v24, 3
  %vm46 = vcmp.lt.s32.totalorder %v24, 4
  %v47 = vsel %vm43, %v27, %v30
  %v48 = vsel %vm46, %v36, 2102212464
  %v49 = vsel %vm45, %v33, %v48
  %v50 = vsel %vm44, %v47, %v49
  %v51 = vsel %vm43, %v30, %v33
  %v52 = vsel %vm46, %v39, 920167782
  %v53 = vsel %vm45, %v36, %v52
  %v54 = vsel %vm44, %v51, %v53
  %v55 = vsel %vm43, %v33, %v36
  %v56 = vsel %vm46, %v42, 1326507024
  %v57 = vsel %vm45, %v39, %v56
  %v58 = vsel %vm44, %v55, %v57
  %v59 = vshll.u32 %v19, 8
  %v60 = vmul.u32.u64.compose %v59, %v58
  %v61 = vextract.low.u32 %v60
  %v62 = vextract.high.u32 %v60
  %v63 = vmul.u32.u64.compose %v59, %v54
  %v64 = vextract.low.u32 %v63
  %v65 = vextract.high.u32 %v63
  %v66 = vmul.u32 %v59, %v50
  %v67 = vadd.s32 %v62, %v64
  %vm68 = vc.u32 %v62, %v64
  %v69 = vadd.s32 %v65, 1
  %v70 = vsel %vm68, %v69, %v65
  %v71 = vadd.s32 %v66, %v70
  %v72 = vadd.s32 %v71, 536870912
  %v73 = vshrl.u32 %v72, 30
  %v74 = vshll.u32 %v73, 30
  %v75 = vsub.s32 %v71, %v74
  %vm76 = vcmp.lt.s32.totalorder %v75, 0
  %v77 = vsub.s32 0, %v75
  %v78 = vsel %vm76, %v77, %v75
  %v79 = vclz %v78
  %v80 = vsub.s32 %v79, 2
  %vm81 = vcmp.gt.s32.totalorder 0, %v80
  %v82 = vsel %vm81, 0, %v80
  %v83 = vsub.s32 32, %v82
  %v84 = vshll.u32 %v75, %v82
  %v85 = vshrl.u32 %v67, %v83
  %v86 = vor.u32 %v84, %v85
  %v87 = vsub.s32 4294967266, %v82
  %v88 = vadd.s32 %v87, 127
  %v89 = vshll.u32 %v88, 23
  %v90 = vor.u32 4788187, %v89
  %v91 = vand.u32 2147483647, %v90
  %v93 = vcvt.s32.f32 %v86
  %v94 = vmul.f32 %v93, %v91
  %v95 = vxor.u32 %v94, 2147483648
  %v96 = vsel %vm13, %v95, %v94
  %v97 = vsub.s32 4, %v73
  %v98 = vsel %vm13, %v97, %v73
  %v99 = vsel %vm12, %v10, %v96
  %v100 = vsel %vm12, 0, %v98
  %v101 = vcosq.f32.pop %v99
  %v102 = vsinq.f32.pop %v99
  %vm103 = vweird.f32 %v10
  %v104 = vand.u32 %v100, 3
  %v105 = vadd.s32 %v100, 3
  %v106 = vand.u32 %v105, 3
  %vm107 = vcmp.lt.s32.totalorder %v104, 2
  %vm108 = vcmp.eq.s32.totalorder %v104, 0
  %v109 = vxor.u32 %v102, 2147483648
  %v110 = vsel %vm108, %v101, %v109
  %vm111 = vcmp.eq.s32.totalorder %v104, 2
  %v112 = vxor.u32 %v101, 2147483648
  %v113 = vsel %vm111, %v112, %v102
  %v114 = vsel %vm107, %v110, %v113
  %vm115 = vcmp.lt.s32.totalorder %v106, 2
  %vm116 = vcmp.eq.s32.totalorder %v106, 0
  %v117 = vxor.u32 %v102, 2147483648
  %v118 = vsel %vm116, %v101, %v117
  %vm119 = vcmp.eq.s32.totalorder %v106, 2
  %v120 = vxor.u32 %v101, 2147483648
  %v121 = vsel %vm119, %v120, %v102
  %v122 = vsel %vm115, %v118, %v121
  %v123 = vrcp.pop %v114
  %v124 = vmul.f32 %v122, %v123
  %v125 = vsel %vm103, nan, %v124
  %v126 = vtanh.pop %v125
  %v127 = vtanh.pop %v126
  %vm128 = vcmask 95232
  %129 = vst.msk [vmem:[%s1] sm:$0x3f] %vm128, %v127
  %v130 = vtanh.pop %v10
  %v131 = vtanh.pop %v130
  %v132 = vtanh.pop %v131
  %v133 = vtanh.pop %v132
  %v134 = vtanh.pop %v133
  %135 = vst.msk [vmem:[%s2] sm:$0x3f] %vm128, %v134
  // Predicated region
  $region6: #{model_forward.1} parent=0 // pred_check
    _
  $region7: #{model_forward.1} parent=0 // pred_check_branch
    %137 = sbr.rel (0) target = $region9
  $region8: #{model_forward.1} parent=0 // pred_region
    _
  $region9: #{model_forward.1} parent=0 // pred_fallthru
    _
  // Predicated region
  $region10: #{model_forward.1} parent=0 // pred_check
    _
  $region11: #{model_forward.1} parent=0 // pred_check_branch
    %139 = sbr.rel (0) target = $region13
  $region12: #{model_forward.1} parent=0 // pred_region
    _
  $region13: #{model_forward.1} parent=0 // pred_fallthru
    _
  // Predicated region
  $region14: #{model_forward.1} parent=0 // pred_check
    _
  $region15: #{model_forward.1} parent=0 // pred_check_branch
    %141 = sbr.rel (0) target = $region17
  $region16: #{model_forward.1} parent=0 // pred_region
    _
  $region17: #{model_forward.1} parent=0 // pred_fallthru
    _
  // Predicated region
  $region18: #{model_forward.1} parent=0 // pred_check
    _
  $region19: #{model_forward.1} parent=0 // pred_check_branch
    %143 = sbr.rel (0) target = $region21
  $region20: #{model_forward.1} parent=0 // pred_region
    _
  $region21: #{model_forward.1} parent=0 // pred_fallthru
    _

</llo_original>
